<compile_context>
chip_gen: v6e
topology: v6e:2x2x1
jax: 0.10.0
libtpu: 0.0.40
codegen_flags: <defaults>
</compile_context>

<pallas_src>
import jax
import jax.numpy as jnp
from jax.experimental import pallas as pl
from jax.experimental.pallas import tpu as pltpu


def _outconv_softmax_kernel(x_ref, w_ref, b_ref, o_ref):
    # x_ref: (Cin, tl)   w_ref: (Cout, Cin)   b_ref: (Cout, 1)   o_ref: (Cout, tl)
    s = jnp.dot(w_ref[...], x_ref[...], preferred_element_type=jnp.float32)
    s = s + b_ref[...]                                   # bias broadcast over lanes
    m = jnp.max(s, axis=0, keepdims=True)                # softmax over channels (sublanes)
    e = jnp.exp(s - m)
    denom = jnp.sum(e, axis=0, keepdims=True)
    inv = pl.reciprocal(denom, approx=False)             # exact: keeps sum==1 to 1e-5
    o_ref[...] = (e * inv).astype(o_ref.dtype)


def _pick_lane_tile(L, Cin, itemsize, budget_bytes):
    """Pick lane tile tl and padded length L_pad (multiple of tl)."""
    per_lane = 2 * Cin * itemsize                        # double-buffered x bytes per lane
    if per_lane * L <= budget_bytes:
        return L, L                                      # whole length fits: 1 slab DMA/batch
    max_lanes = max(128, (budget_bytes // per_lane) // 128 * 128)
    if L % 128 == 0:
        tl, d = 128, 128
        while d <= min(L, max_lanes):                    # largest 128-multiple divisor in budget
            if L % d == 0:
                tl = d
            d += 128
        return tl, L
    # Rare path: very long L that is not a multiple of 128 -> pad once outside, slice after.
    tl = max_lanes
    L_pad = ((L + tl - 1) // tl) * tl
    return tl, L_pad


def outconv_softmax(x, w, b):
    """x: (N, Cin, L) f32 or bf16; w: (Cout, Cin, 1) (PyTorch Conv1d k=1); b: (Cout,)."""
    N, Cin, L = x.shape
    Cout = w.shape[0]

    if x.dtype not in (jnp.float32, jnp.bfloat16):
        x = x.astype(jnp.float32)
    x_dtype = x.dtype
    itemsize = jnp.dtype(x_dtype).itemsize

    w2 = w.reshape(Cout, Cin).astype(x_dtype)            # tiny; match MXU input dtype
    b2 = b.reshape(Cout, 1).astype(jnp.float32)          # epilogue stays f32

    budget = 8 * 1024 * 1024                             # x double-buffer budget (v5e-safe)
    tl, L_pad = _pick_lane_tile(L, Cin, itemsize, budget)
    if L_pad != L:
        x = jnp.pad(x, ((0, 0), (0, 0), (0, L_pad - L)))
    num_l = L_pad // tl

    x_spec_kwargs = {}
    if num_l >= 4:
        # Long streaming grids: a third buffer hides DMA issue latency (compute ~ 0).
        x_spec_kwargs["pipeline_mode"] = pl.Buffered(3)

    cost = pl.CostEstimate(
        flops=int(2 * N * Cout * Cin * L_pad),
        transcendentals=int(N * Cout * L_pad),
        bytes_accessed=int(N * Cin * L_pad * itemsize
                           + N * Cout * L_pad * itemsize
                           + Cout * Cin * itemsize + Cout * 4),
    )

    out = pl.pallas_call(
        _outconv_softmax_kernel,
        out_shape=jax.ShapeDtypeStruct((N, Cout, L_pad), x_dtype),
        grid=(N, num_l),
        in_specs=[
            pl.BlockSpec((None, Cin, tl), lambda n, j: (n, 0, j), **x_spec_kwargs),
            pl.BlockSpec((Cout, Cin), lambda n, j: (0, 0)),        # weights: grid-resident
            pl.BlockSpec((Cout, 1), lambda n, j: (0, 0)),          # bias: grid-resident
        ],
        out_specs=pl.BlockSpec((None, Cout, tl), lambda n, j: (n, 0, j)),
        compiler_params=pltpu.CompilerParams(
            dimension_semantics=("parallel", "parallel")),
        cost_estimate=cost,
    )(x, w2, b2)

    if L_pad != L:
        out = out[:, :, :L]
    return out


if __name__ == "__main__":
    key = jax.random.PRNGKey(0)
    kx, kw, kb = jax.random.split(key, 3)
    # OutConv(in_channels=64, out_channels=3) as used at the end of the 1D U-Net.
    N, Cin, Cout, L = 2, 64, 3, 256
    x = jax.random.normal(kx, (N, Cin, L), jnp.float32)
    w = jax.random.normal(kw, (Cout, Cin, 1), jnp.float32) / jnp.sqrt(float(Cin))
    b = 0.01 * jax.random.normal(kb, (Cout,), jnp.float32)

    out = jax.jit(outconv_softmax)(x, w, b)
    out = jax.block_until_ready(out)

    # Pure-JAX reference: 1x1 conv + softmax over channel dim.
    ref = jnp.einsum("oc,ncl->nol", w.reshape(Cout, Cin), x) + b[None, :, None]
    ref = jax.nn.softmax(ref, axis=1)

    assert out.shape == (N, Cout, L), out.shape
    assert bool(jnp.all(jnp.isfinite(out)))
    assert bool(jnp.allclose(out.sum(axis=1), 1.0, atol=1e-5))      # softmax over dim=1
    assert bool(jnp.allclose(out, ref, atol=1e-5, rtol=1e-5))
    print("KERNEL_OK")
</pallas_src>

<mosaic_0001>
module attributes {stable_mosaic.version = 11 : i64} {
  func.func @_outconv_softmax_kernel(%arg0: i32, %arg1: i32, %arg2: memref<1x64x256xf32, #tpu.memory_space<vmem>>, %arg3: memref<3x64xf32, #tpu.memory_space<vmem>>, %arg4: memref<3x1xf32, #tpu.memory_space<vmem>>, %arg5: memref<1x3x256xf32, #tpu.memory_space<vmem>>) attributes {dimension_semantics = [#tpu.dimension_semantics<parallel>, #tpu.dimension_semantics<parallel>], iteration_bounds = array<i64: 2, 1>, scalar_prefetch = 0 : i64, scratch_operands = 0 : i64, tpu.core_type = #tpu.core_type<tc>, window_params = [{transform_indices = @transform_0, window_bounds = array<i64: 1, 64, 256>}, {pipeline_mode = #tpu.pipeline_mode<synchronous>, transform_indices = @transform_1, window_bounds = array<i64: 3, 64>}, {pipeline_mode = #tpu.pipeline_mode<synchronous>, transform_indices = @transform_2, window_bounds = array<i64: 3, 1>}, {transform_indices = @transform_3, window_bounds = array<i64: 1, 3, 256>}]} {
    %c0 = arith.constant 0 : index
    %c0_0 = arith.constant 0 : index
    %0 = vector.load %arg3[%c0, %c0_0] : memref<3x64xf32, #tpu.memory_space<vmem>>, vector<3x64xf32>
    %c0_1 = arith.constant 0 : index
    %c0_2 = arith.constant 0 : index
    %c0_3 = arith.constant 0 : index
    %1 = vector.load %arg2[%c0_1, %c0_2, %c0_3] : memref<1x64x256xf32, #tpu.memory_space<vmem>>, vector<1x64x256xf32>
    %2 = vector.shape_cast %1 : vector<1x64x256xf32> to vector<64x256xf32>
    %cst = arith.constant dense<0.000000e+00> : vector<3x256xf32>
    %3 = tpu.matmul %0, %2, %cst {dimension_numbers = #tpu.dot_dimension_numbers<[1], [0], [0], [1], [0, 0, 1, 1], [], []>} : vector<3x64xf32>, vector<64x256xf32>, vector<3x256xf32> -> vector<3x256xf32>
    %c0_4 = arith.constant 0 : index
    %c0_5 = arith.constant 0 : index
    %4 = vector.load %arg4[%c0_4, %c0_5] : memref<3x1xf32, #tpu.memory_space<vmem>>, vector<3x1xf32>
    %5 = vector.broadcast %4 : vector<3x1xf32> to vector<3x256xf32>
    %6 = arith.addf %3, %5 : vector<3x256xf32>
    %cst_6 = arith.constant dense<0xFF800000> : vector<256xf32>
    %7 = vector.multi_reduction <maximumf>, %6, %cst_6 [0] : vector<3x256xf32> to vector<256xf32>
    %8 = vector.shape_cast %7 : vector<256xf32> to vector<1x256xf32>
    %9 = vector.broadcast %8 : vector<1x256xf32> to vector<3x256xf32>
    %10 = arith.subf %6, %9 : vector<3x256xf32>
    %11 = math.exp %10 : vector<3x256xf32>
    %cst_7 = arith.constant dense<0.000000e+00> : vector<256xf32>
    %12 = vector.multi_reduction <add>, %11, %cst_7 [0] : vector<3x256xf32> to vector<256xf32>
    %13 = vector.shape_cast %12 : vector<256xf32> to vector<1x256xf32>
    %14 = tpu.reciprocal %13 : vector<1x256xf32> -> vector<1x256xf32>
    %15 = vector.broadcast %14 : vector<1x256xf32> to vector<3x256xf32>
    %16 = arith.mulf %11, %15 : vector<3x256xf32>
    %c0_8 = arith.constant 0 : index
    %c0_9 = arith.constant 0 : index
    %c0_10 = arith.constant 0 : index
    %17 = vector.load %arg5[%c0_8, %c0_9, %c0_10] : memref<1x3x256xf32, #tpu.memory_space<vmem>>, vector<1x3x256xf32>
    %18 = vector.shape_cast %17 : vector<1x3x256xf32> to vector<3x256xf32>
    %19 = vector.shape_cast %16 : vector<3x256xf32> to vector<1x3x256xf32>
    tpu.vector_store %arg5[%c0_8, %c0_9, %c0_10], %19 {strides = array<i32>} : memref<1x3x256xf32, #tpu.memory_space<vmem>>, vector<1x3x256xf32>,
    return
  }
  func.func @transform_0(%arg0: i32, %arg1: i32) -> (i32, i32, i32) {
    %c0_i32 = arith.constant 0 : i32
    %c0_i32_0 = arith.constant 0 : i32
    return %arg0, %c0_i32, %arg1 : i32, i32, i32
  }
  func.func @transform_1(%arg0: i32, %arg1: i32) -> (i32, i32) {
    %c0_i32 = arith.constant 0 : i32
    %c0_i32_0 = arith.constant 0 : i32
    %c0_i32_1 = arith.constant 0 : i32
    return %c0_i32, %c0_i32_0 : i32, i32
  }
  func.func @transform_2(%arg0: i32, %arg1: i32) -> (i32, i32) {
    %c0_i32 = arith.constant 0 : i32
    %c0_i32_0 = arith.constant 0 : i32
    %c0_i32_1 = arith.constant 0 : i32
    return %c0_i32, %c0_i32_0 : i32, i32
  }
  func.func @transform_3(%arg0: i32, %arg1: i32) -> (i32, i32, i32) {
    %c0_i32 = arith.constant 0 : i32
    %c0_i32_0 = arith.constant 0 : i32
    return %arg0, %c0_i32, %arg1 : i32, i32, i32
  }
}

</mosaic_0001>

<llo_original>
// kernel: outconv_softmax.1
$region0: #{outconv_softmax.1}
  #allocation0 [shape = 'u32[]', space=smem, size = 0x4, offset = 0x4, fixed_abs, tag = 'smem constant byte address 0x4 - core index']
  #allocation1 [shape = 'u32[144,128]{1,0:T(1,128)}', space=vmem, size = 0x12000, scoped, tag = 'internal scratch']
  %s0 = inlined_call_operand.hbm [shape: f32[2,64,256], index: 0, kind: input, shape index: {}]
  %s1 = inlined_call_operand.vmem [shape: f32[3,64], index: 1, kind: input, shape index: {}]
  %s2 = inlined_call_operand.vmem [shape: f32[3,1], index: 2, kind: input, shape index: {}]
  %s3 = inlined_call_operand.vmem [shape: f32[2,3,256], index: 3, kind: output, shape index: {}]
  %s4 = sld [smem:[#allocation0]]
  $region49: #{outconv_softmax.1} parent=0
    _
  %s6 = ssub.s32 1, %s4
  %s7 = scalar_select 0, %s6, %s4
  $region1: #{outconv_softmax.1} parent=0
    #allocation2 [shape = 'u8[131072]{0}', space=vmem, size = 0x20000, scoped, tag = 'input window, operand 0']
    #allocation3 [shape = 's32[2]{0}', space=sflag, size = 0x8, scoped, tag = 'scoped memory for outconv_softmax.1']
    %8 = vsyncpa [#allocation3], 0
    %s9 = scalar_lea.sflag [#allocation3], 1
    %10 = vsyncpa %s9, 0
    loop: start=0, step=1, limit=4
    $region2: #{outconv_softmax.1} parent=1 // loop_pre_header
      _
    $region3: #{outconv_softmax.1} parent=1 // loop_header
      %s12 = sphi 0, %s16
      %p13 = scmp.ge.s32.totalorder %s12, 4
      %s19 = sphi 0, %s31
      %s20 = sphi 0, %s27
      %s21 = sphi 0, %s19
      %s22 = sphi 0, %s20
      %s23 = sphi 0, %s21
      %s24 = sphi 0, %s22
      %s36 = sphi 0, %s38
      %s39 = sphi 0, %s36
      %s40 = sphi 0, %s39
      %s56 = sphi 0, %s40
      %s60 = sphi 0, %s60
      %s62 = sphi 0, %s60
      %s63 = sphi 0, %s62
      %s77 = sphi 0, %s63
      %s81 = sphi 0, %s81
      %s83 = sphi 0, %s81
      %s84 = sphi 0, %s83
      %s98 = sphi 0, %s84
      %s106 = sphi 0, %s108
      %s109 = sphi 0, %s106
      %s110 = sphi 0, %s109
      %s126 = sphi 0, %s110
    $region4: #{outconv_softmax.1} parent=1 // loop_header_branch
      %15 = sbr.rel (%p13) target = $region8
    $region5: #{outconv_softmax.1} parent=1 // loop_body
      %s17 = ssub.s32 %s12, 1
      %s18 = ssub.s32 %s12, 2
      %s25 = sadd.s32 1, %s20
      %p26 = scmp.ge.s32.totalorder %s25, 1
      %s27 = scalar_select %p26, 0, %s25
      %s28 = sadd.s32 1, %s19
      %s29 = scalar_select %p26, %s28, %s19
      %p30 = scmp.ge.s32.totalorder %s29, 2
      %s31 = scalar_select %p30, 0, %s29
      %s32 = ssub.s32 %s19, %s31
      %s33 = ssub.s32 %s20, %s27
      %s34 = sor.u32 %s32, %s33
      %p35 = scmp.eq.s32.totalorder %s34, 0
      %s37 = sadd.s32 %s36, 1
      %s38 = scalar_select %p35, %s36, %s37
      %p41 = pneg %p35
      %p42 = scmp.eq.s32.totalorder %s12, 1
      %p43 = por %p41, %p42
      %p44 = scmp.ne.s32.totalorder %s36, %s39
      %p45 = scmp.eq.s32.totalorder %s12, 0
      %p46 = por %p44, %p45
      %p47 = scmp.ne.s32.totalorder %s36, %s39
      %p48 = scmp.eq.s32.totalorder %s17, 1
      %p49 = por %p47, %p48
      %p50 = scmp.ne.s32.totalorder %s39, %s40
      %p51 = scmp.eq.s32.totalorder %s17, 0
      %p52 = por %p50, %p51
      %p53 = scmp.ne.s32.totalorder %s39, %s40
      %p54 = scmp.eq.s32.totalorder %s18, 1
      %p55 = por %p53, %p54
      %p57 = scmp.ne.s32.totalorder %s40, %s56
      %p58 = scmp.eq.s32.totalorder %s18, 0
      %p59 = por %p57, %p58
      %s61 = sadd.s32 %s60, 1
      %p64 = scmp.eq.s32.totalorder %s12, 1
      %p65 = scmp.ne.s32.totalorder %s60, %s62
      %p66 = scmp.eq.s32.totalorder %s12, 0
      %p67 = por %p65, %p66
      %p68 = scmp.ne.s32.totalorder %s60, %s62
      %p69 = scmp.eq.s32.totalorder %s17, 1
      %p70 = por %p68, %p69
      %p71 = scmp.ne.s32.totalorder %s62, %s63
      %p72 = scmp.eq.s32.totalorder %s17, 0
      %p73 = por %p71, %p72
      %p74 = scmp.ne.s32.totalorder %s62, %s63
      %p75 = scmp.eq.s32.totalorder %s18, 1
      %p76 = por %p74, %p75
      %p78 = scmp.ne.s32.totalorder %s63, %s77
      %p79 = scmp.eq.s32.totalorder %s18, 0
      %p80 = por %p78, %p79
      %s82 = sadd.s32 %s81, 1
      %p85 = scmp.eq.s32.totalorder %s12, 1
      %p86 = scmp.ne.s32.totalorder %s81, %s83
      %p87 = scmp.eq.s32.totalorder %s12, 0
      %p88 = por %p86, %p87
      %p89 = scmp.ne.s32.totalorder %s81, %s83
      %p90 = scmp.eq.s32.totalorder %s17, 1
      %p91 = por %p89, %p90
      %p92 = scmp.ne.s32.totalorder %s83, %s84
      %p93 = scmp.eq.s32.totalorder %s17, 0
      %p94 = por %p92, %p93
      %p95 = scmp.ne.s32.totalorder %s83, %s84
      %p96 = scmp.eq.s32.totalorder %s18, 1
      %p97 = por %p95, %p96
      %p99 = scmp.ne.s32.totalorder %s84, %s98
      %p100 = scmp.eq.s32.totalorder %s18, 0
      %p101 = por %p99, %p100
      %s102 = ssub.s32 %s19, %s31
      %s103 = ssub.s32 %s20, %s27
      %s104 = sor.u32 %s102, %s103
      %p105 = scmp.eq.s32.totalorder %s104, 0
      %s107 = sadd.s32 %s106, 1
      %s108 = scalar_select %p105, %s106, %s107
      %p111 = pneg %p105
      %p112 = scmp.eq.s32.totalorder %s12, 1
      %p113 = por %p111, %p112
      %p114 = scmp.ne.s32.totalorder %s106, %s109
      %p115 = scmp.eq.s32.totalorder %s12, 0
      %p116 = por %p114, %p115
      %p117 = scmp.ne.s32.totalorder %s106, %s109
      %p118 = scmp.eq.s32.totalorder %s17, 1
      %p119 = por %p117, %p118
      %p120 = scmp.ne.s32.totalorder %s109, %s110
      %p121 = scmp.eq.s32.totalorder %s17, 0
      %p122 = por %p120, %p121
      %p123 = scmp.ne.s32.totalorder %s109, %s110
      %p124 = scmp.eq.s32.totalorder %s18, 1
      %p125 = por %p123, %p124
      %p127 = scmp.ne.s32.totalorder %s110, %s126
      %p128 = scmp.eq.s32.totalorder %s18, 0
      %p129 = por %p127, %p128
      %p130 = scmp.le.s32.totalorder 1, %s12
      %p131 = scmp.lt.s32.totalorder %s12, 3
      %p132 = pnand %p130, %p131
      %p133 = pneg %p132
      // Predicated region
      $region9: #{outconv_softmax.1} parent=5 // pred_check
        _
      $region10: #{outconv_softmax.1} parent=5 // pred_check_branch
        %135 = sbr.rel (%p132) target = $region12
      $region11: #{outconv_softmax.1} parent=5 // pred_region
        %s136 = ssub.s32 %s12, 1
        // Predicated region
        $region13: #{outconv_softmax.1} parent=11 // pred_check
          %p137 = pneg %p73
        $region14: #{outconv_softmax.1} parent=11 // pred_check_branch
          %139 = sbr.rel (%p137) target = $region16
        $region15: #{outconv_softmax.1} parent=11 // pred_region
          _
        $region16: #{outconv_softmax.1} parent=11 // pred_fallthru
          _
        // Predicated region
        $region17: #{outconv_softmax.1} parent=11 // pred_check
          %p140 = pneg %p94
        $region18: #{outconv_softmax.1} parent=11 // pred_check_branch
          %142 = sbr.rel (%p140) target = $region20
        $region19: #{outconv_softmax.1} parent=11 // pred_region
          _
        $region20: #{outconv_softmax.1} parent=11 // pred_fallthru
          _
      $region12: #{outconv_softmax.1} parent=5 // pred_fallthru
        _
      %p143 = scmp.lt.s32.totalorder %s12, 2
      // Predicated region
      $region21: #{outconv_softmax.1} parent=5 // pred_check
        %p144 = pneg %p143
      $region22: #{outconv_softmax.1} parent=5 // pred_check_branch
        %146 = sbr.rel (%p144) target = $region24
      $region23: #{outconv_softmax.1} parent=5 // pred_region
        // Predicated region
        $region25: #{outconv_softmax.1} parent=23 // pred_check
          %p147 = pneg %p46
        $region26: #{outconv_softmax.1} parent=23 // pred_check_branch
          %149 = sbr.rel (%p147) target = $region28
        $region27: #{outconv_softmax.1} parent=23 // pred_region
          %s150 = sand.u32 %s36, 1
          %s151 = scalar_lea.sflag [#allocation3], %s150
          %s152 = sand.u32 %s36, 1
          %s153 = smul.addr %s152, 128
          %s154 = scalar_lea.vmem [#allocation2], %s153
          %s155 = smul.u32 2, %s20
          %s157 = ssub.s32 2048, 2048
          %158 = vsyncadd %s151, %s157
          %s159 = smul.addr %s19, 16
          %s160 = sadd.s32 %s155, %s159
          %s161 = smul.addr %s160, 128
          %s162 = scalar_lea.hbm %s0, %s161
          %s163 = sshll.u32 %s154, 4
          %s164 = int_to_ptr.vmem [resolvable:$true] %s163
          %169 = dma.hbm_to_vmem [thread:$0]  %s162, 2048, %s164, %s151, 256, 256, 16
        $region28: #{outconv_softmax.1} parent=23 // pred_fallthru
          _
      $region24: #{outconv_softmax.1} parent=5 // pred_fallthru
        _
      %p170 = scmp.le.s32.totalorder 1, %s12
      %p171 = scmp.lt.s32.totalorder %s12, 3
      %p172 = pnand %p170, %p171
      %p173 = pneg %p172
      // Predicated region
      $region29: #{outconv_softmax.1} parent=5 // pred_check
        _
      $region30: #{outconv_softmax.1} parent=5 // pred_check_branch
        %175 = sbr.rel (%p172) target = $region32
      $region31: #{outconv_softmax.1} parent=5 // pred_region
        %s176 = ssub.s32 %s12, 1
        %s177 = sand.u32 %s39, 1
        %s178 = scalar_lea.sflag [#allocation3], %s177
        %s179 = sand.u32 %s39, 1
        %s180 = smul.addr %s179, 128
        %s181 = scalar_lea.vmem [#allocation2], %s180
        // Predicated region
        $region33: #{outconv_softmax.1} parent=31 // pred_check
          %p182 = pneg %p52
        $region34: #{outconv_softmax.1} parent=31 // pred_check_branch
          %184 = sbr.rel (%p182) target = $region36
        $region35: #{outconv_softmax.1} parent=31 // pred_region
          %185 = dma.done %s178, 2048
        $region36: #{outconv_softmax.1} parent=31 // pred_fallthru
          _
        %s186 = sand.u32 %s39, 1
        %s187 = scalar_lea.sflag [#allocation3], %s186
        %s188 = sand.u32 %s39, 1
        %s189 = smul.addr %s188, 128
        %s190 = scalar_lea.vmem [#allocation2], %s189
        %p191 = pneg %p52
        %p192 = pneg %p49
        %p193 = pneg %p73
        %p194 = pneg %p70
        %p195 = pneg %p94
        %p196 = pneg %p91
        %p197 = pneg %p122
        %p198 = pneg %p119
        %s199 = smul.u32 2, %s22
        %p200 = scmp.lt.s32.totalorder %s21, 1
        %s201 = scalar_select %p200, %s21, 1
        %p202 = scmp.lt.s32.totalorder %s199, 1
        %s203 = scalar_select %p202, %s199, 1
        %s204 = smul.addr %s201, 2
        %s205 = sadd.s32 %s203, %s204
        %s206 = smul.addr %s205, 4
        %s207 = scalar_lea.vmem %s3, %s206
        %s208 = smul.u32 2, %s22
        %s209 = smul.u32 2, %s22
        %p210 = scmp.lt.s32.totalorder %s21, 1
        %s211 = scalar_select %p210, %s21, 1
        %p212 = scmp.lt.s32.totalorder %s209, 1
        %s213 = scalar_select %p212, %s209, 1
        %s214 = smul.addr %s211, 2
        %s215 = sadd.s32 %s213, %s214
        %s216 = smul.addr %s215, 4
        %s217 = scalar_lea.vmem %s3, %s216
        %s218 = smul.u32 2, %s22
        %v219 = vld [vmem:[%s1] sm:$0x7]
        %v220 = vld [vmem:[%s181] sm:$0xff]
        %v221 = vld [vmem:[%s181 + $0x8] sm:$0xff]
        %v222 = vld [vmem:[%s181 + $0x10] sm:$0xff]
        %v223 = vld [vmem:[%s181 + $0x18] sm:$0xff]
        %v224 = vld [vmem:[%s181 + $0x20] sm:$0xff]
        %v225 = vld [vmem:[%s181 + $0x28] sm:$0xff]
        %v226 = vld [vmem:[%s181 + $0x30] sm:$0xff]
        %v227 = vld [vmem:[%s181 + $0x38] sm:$0xff]
        %v228 = vld [vmem:[%s181 + $0x40] sm:$0xff]
        %v229 = vld [vmem:[%s181 + $0x48] sm:$0xff]
        %v230 = vld [vmem:[%s181 + $0x50] sm:$0xff]
        %v231 = vld [vmem:[%s181 + $0x58] sm:$0xff]
        %v232 = vld [vmem:[%s181 + $0x60] sm:$0xff]
        %v233 = vld [vmem:[%s181 + $0x68] sm:$0xff]
        %v234 = vld [vmem:[%s181 + $0x70] sm:$0xff]
        %v235 = vld [vmem:[%s181 + $0x78] sm:$0xff]
        %v236 = vld [vmem:[%s2] sm:$0x7]
        %238 = vset.pattern.permute.xlu0 0
        %239 = vperm.xlu0 %238, %v236
        %v240 = vpop.permute.xlu0 %239
        %vm242 = vcmask 523264
        %v244 = vsel %vm242, %v219, 0
        %246 = vmatprep.subr.mxu0 0.0
        %247 = vmatpush1.msra.mxu0 0.0
        %248 = vmatprep.subr.mxu0 0.0
        %249 = vmatpush1.msra.mxu0 0.0
        %250 = vmatprep.subr.mxu0 0.0
        %251 = vmatpush1.msra.mxu0 0.0
        %252 = vmatprep.subr.mxu0 0.0
        %253 = vmatpush1.msra.mxu0 0.0
        %254 = vmatprep.subr.mxu0 0.0
        %255 = vmatpush1.msra.mxu0 0.0
        %256 = vmatprep.subr.mxu0 0.0
        %257 = vmatpush1.msra.mxu0 0.0
        %258 = vmatprep.subr.mxu0 0.0
        %259 = vmatpush1.msra.mxu0 0.0
        %260 = vmatprep.subr.mxu0 0.0
        %261 = vmatpush1.msra.mxu0 0.0
        %262 = vmatprep.subr.mxu0 %v235
        %263 = vmatpush1.msra.mxu0 %v234
        %264 = vmatprep.subr.mxu0 %v233
        %265 = vmatpush1.msra.mxu0 %v232
        %266 = vmatprep.subr.mxu0 %v231
        %267 = vmatpush1.msra.mxu0 %v230
        %268 = vmatprep.subr.mxu0 %v229
        %269 = vmatpush1.msra.mxu0 %v228
        %270 = vmatprep.subr.mxu0 %v227
        %271 = vmatpush1.msra.mxu0 %v226
        %272 = vmatprep.subr.mxu0 %v225
        %273 = vmatpush1.msra.mxu0 %v224
        %274 = vmatprep.subr.mxu0 %v223
        %275 = vmatpush1.msra.mxu0 %v222
        %276 = vmatprep.subr.mxu0 %v221
        %277 = vmatpush1.msra.mxu0 %v220
        %278 = vmatprep.subr.mxu0 0.0
        %279 = vmatpush2.msra.mxu0 0.0
        %280 = vmatprep.subr.mxu0 0.0
        %281 = vmatpush2.msra.mxu0 0.0
        %282 = vmatprep.subr.mxu0 0.0
        %283 = vmatpush2.msra.mxu0 0.0
        %284 = vmatprep.subr.mxu0 0.0
        %285 = vmatpush2.msra.mxu0 0.0
        %286 = vmatprep.subr.mxu0 0.0
        %287 = vmatpush2.msra.mxu0 0.0
        %288 = vmatprep.subr.mxu0 0.0
        %289 = vmatpush2.msra.mxu0 0.0
        %290 = vmatprep.subr.mxu0 0.0
        %291 = vmatpush2.msra.mxu0 0.0
        %292 = vmatprep.subr.mxu0 0.0
        %293 = vmatpush2.msra.mxu0 0.0
        %294 = vmatprep.subr.mxu0 0.0
        %295 = vmatpush2.msra.mxu0 0.0
        %296 = vmatprep.subr.mxu0 0.0
        %297 = vmatpush2.msra.mxu0 0.0
        %298 = vmatprep.subr.mxu0 0.0
        %299 = vmatpush2.msra.mxu0 0.0
        %300 = vmatprep.subr.mxu0 0.0
        %301 = vmatpush2.msra.mxu0 0.0
        %302 = vmatprep.subr.mxu0 0.0
        %303 = vmatpush2.msra.mxu0 0.0
        %304 = vmatprep.subr.mxu0 0.0
        %305 = vmatpush2.msra.mxu0 0.0
        %306 = vmatprep.subr.mxu0 0.0
        %307 = vmatpush2.msra.mxu0 0.0
        %308 = vmatprep.subr.mxu0 0.0
        %309 = vmatpush2.msra.mxu0 0.0
        %310 = vmatprep.mubr.f32.mxu0 0.0
        %311 = vmatmul.mubr.f32.gmra.mxu0 %v244
        %v312 = vpop.f32.mrf.mxu0
        %v313 = vadd.f32 %v240, %v312
        %v314 = vpop.f32.mrf.mxu0
        %v315 = vadd.f32 %v240, %v314
        %316 = vdwg.mxu0
        %vm317 = vcmask 1042432
        %v318 = vsel %vm317, %v313, -inf
        %v319 = vrot.slane %v318, 4
        %v320 = vmax.f32 %v318, %v319
        %v321 = vrot.slane %v320, 2
        %v322 = vmax.f32 %v320, %v321
        %v323 = vrot.slane %v322, 1
        %v324 = vmax.f32 %v322, %v323
        %v325 = vsel %vm317, %v315, -inf
        %v326 = vrot.slane %v325, 4
        %v327 = vmax.f32 %v325, %v326
        %v328 = vrot.slane %v327, 2
        %v329 = vmax.f32 %v327, %v328
        %v330 = vrot.slane %v329, 1
        %v331 = vmax.f32 %v329, %v330
        %v332 = vsub.f32 %v313, %v324
        %v333 = vsub.f32 %v315, %v331
        %v334 = vmul.f32 %v332, 1.442695
        %v335 = vpow.pop %v334
        %v336 = vmul.f32 %v333, 1.442695
        %v337 = vpow.pop %v336
        %v338 = vsel %vm317, %v335, 0.0
        %v339 = vrot.slane %v338, 4
        %v340 = vadd.f32 %v338, %v339
        %v341 = vrot.slane %v340, 2
        %v342 = vadd.f32 %v340, %v341
        %v343 = vrot.slane %v342, 1
        %v344 = vadd.f32 %v342, %v343
        %v345 = vsel %vm317, %v337, 0.0
        %v346 = vrot.slane %v345, 4
        %v347 = vadd.f32 %v345, %v346
        %v348 = vrot.slane %v347, 2
        %v349 = vadd.f32 %v347, %v348
        %v350 = vrot.slane %v349, 1
        %v351 = vadd.f32 %v349, %v350
        %v352 = vrcp.pop %v344
        %v353 = vrcp.pop %v351
        %v354 = vmul.f32 %v335, %v352
        %v355 = vmul.f32 %v337, %v353
        %v358 = vcombine.low %v354, %v355
        %360 = vst [vmem:[%s217] sm:$0x77] %v358
        %s361 = smul.u32 2, %s22
        %p362 = scmp.lt.s32.totalorder %s21, 1
        %s363 = scalar_select %p362, %s21, 1
        %p364 = scmp.lt.s32.totalorder %s361, 1
        %s365 = scalar_select %p364, %s361, 1
        %s366 = smul.addr %s363, 2
        %s367 = sadd.s32 %s365, %s366
        %s368 = smul.addr %s367, 4
        %s369 = scalar_lea.vmem %s3, %s368
        // Predicated region
        $region37: #{outconv_softmax.1} parent=31 // pred_check
          %p370 = pneg %p119
        $region38: #{outconv_softmax.1} parent=31 // pred_check_branch
          %372 = sbr.rel (%p370) target = $region40
        $region39: #{outconv_softmax.1} parent=31 // pred_region
          %s373 = smul.u32 2, %s22
        $region40: #{outconv_softmax.1} parent=31 // pred_fallthru
          _
      $region32: #{outconv_softmax.1} parent=5 // pred_fallthru
        _
      %p374 = scmp.le.s32.totalorder 2, %s12
      // Predicated region
      $region41: #{outconv_softmax.1} parent=5 // pred_check
        %p375 = pneg %p374
      $region42: #{outconv_softmax.1} parent=5 // pred_check_branch
        %377 = sbr.rel (%p375) target = $region44
      $region43: #{outconv_softmax.1} parent=5 // pred_region
        %s378 = ssub.s32 %s12, 2
        // Predicated region
        $region45: #{outconv_softmax.1} parent=43 // pred_check
          %p379 = pneg %p125
        $region46: #{outconv_softmax.1} parent=43 // pred_check_branch
          %381 = sbr.rel (%p379) target = $region48
        $region47: #{outconv_softmax.1} parent=43 // pred_region
          %s382 = smul.u32 2, %s24
          %p383 = scmp.lt.s32.totalorder %s23, 1
          %s384 = scalar_select %p383, %s23, 1
          %p385 = scmp.lt.s32.totalorder %s382, 1
          %s386 = scalar_select %p385, %s382, 1
          %s387 = smul.addr %s384, 2
          %s388 = sadd.s32 %s386, %s387
          %s389 = smul.addr %s388, 4
          %s390 = scalar_lea.vmem %s3, %s389
        $region48: #{outconv_softmax.1} parent=43 // pred_fallthru
          _
      $region44: #{outconv_softmax.1} parent=5 // pred_fallthru
        _
    $region6: #{outconv_softmax.1} parent=1 // loop_footer
      %s16 = sadd.s32 1, %s12
    $region7: #{outconv_softmax.1} parent=1 // loop_footer_branch
      %11 = sbr.rel target = $region3
    $region8: #{outconv_softmax.1} parent=1 // loop_exit
      _
    %391 = vsyncpa [#allocation3], 1
    %s392 = scalar_lea.sflag [#allocation3], 1
    %393 = vsyncpa %s392, 1

</llo_original>
